<compile_context>
chip_gen: v7x
topology: tpu7x:2x2x1
jax: 0.10.0
libtpu: 0.0.40
codegen_flags: <defaults>
</compile_context>

<pallas_src>
import jax
import jax.numpy as jnp
import numpy as np
from jax.experimental import pallas as pl
from jax.experimental.pallas import tpu as pltpu

HIDDEN = 256          # fixed by the module definition
LEAKY_SLOPE = 0.01    # F.leaky_relu default negative_slope
BN_EPS = 1e-5
LANE = 128
SUBLANE_BF16 = 16     # bf16 packs 2 rows per sublane
BATCH_TILE = 256      # full MXU height on v6e/v7x; 2x128 on v5e


def _round_up(n, m):
    return ((n + m - 1) // m) * m


# ---------------------------------------------------------------------------
# Kernel
# ---------------------------------------------------------------------------
def dqn_kernel(x_ref,
               w1_ref, b1_ref,
               w2_ref, b2_ref,
               w3_ref, b3_ref,
               o_ref):
    """Fused forward pass for one batch tile.

    BN affines are pre-folded into (w2, b2) / (w3, b3); dropout is identity at
    inference.  Matmul operands are bf16, accumulation + elementwise are f32.
    """
    x = x_ref[...]                                             # [TB, S_pad] bf16

    # fc1 + leaky_relu  (bn1 folded into fc2)
    h = jnp.dot(x, w1_ref[...],
                preferred_element_type=jnp.float32) + b1_ref[...]
    h = jnp.where(h > 0, h, LEAKY_SLOPE * h)

    # fc2 (with bn1 folded in) + leaky_relu  (bn2 folded into fc3)
    h = jnp.dot(h.astype(jnp.bfloat16), w2_ref[...],
                preferred_element_type=jnp.float32) + b2_ref[...]
    h = jnp.where(h > 0, h, LEAKY_SLOPE * h)

    # dropout(p=0.6): identity at inference
    # fc3 (with bn2 folded in), lane-dense padded output
    o_ref[...] = jnp.dot(h.astype(jnp.bfloat16), w3_ref[...],
                         preferred_element_type=jnp.float32) + b3_ref[...]


# ---------------------------------------------------------------------------
# Host-side parameter prep: fold BN, pad to lanes, cast matmul operands
# ---------------------------------------------------------------------------
def prepare_kernel_params(params):
    (w1, b1, s1, t1, w2, b2, s2, t2, w3, b3) = params
    S = w1.shape[0]
    A = w3.shape[1]

    # Fold bn1 into fc2 and bn2 into fc3:
    #   (h * s + t) @ W + b  ==  h @ (s^T * W) + (t @ W + b)
    w2f = w2 * s1.reshape(-1, 1)
    b2f = b2 + t1 @ w2
    w3f = w3 * s2.reshape(-1, 1)
    b3f = b3 + t2 @ w3

    # Zero-pad feature dims up to lane multiples (exact for matmul).
    S_pad = _round_up(S, LANE)
    A_pad = _round_up(A, LANE)
    w1p = jnp.zeros((S_pad, HIDDEN), jnp.float32).at[:S, :].set(w1)
    w3p = jnp.zeros((HIDDEN, A_pad), jnp.float32).at[:, :A].set(w3f)
    b3p = jnp.zeros((1, A_pad), jnp.float32).at[:, :A].set(b3f)

    kernel_params = (w1p.astype(jnp.bfloat16), b1,
                     w2f.astype(jnp.bfloat16), b2f,
                     w3p.astype(jnp.bfloat16), b3p)
    meta = (S, S_pad, A, A_pad)
    return kernel_params, meta


# ---------------------------------------------------------------------------
# Wrapper
# ---------------------------------------------------------------------------
def dqn_forward(x, kernel_params, meta, batch_tile=BATCH_TILE):
    """x: [B, state_size] f32 -> [B, action_size] f32."""
    w1, b1, w2, b2, w3, b3 = kernel_params
    S, S_pad, A, A_pad = meta
    B = x.shape[0]

    # Batch tile: full MXU-height tiles for big batches, one packing-aligned
    # tile (== whole padded batch) for small batches.
    TB = batch_tile if B >= batch_tile else _round_up(B, SUBLANE_BF16)
    B_pad = _round_up(B, TB)
    n_tiles = B_pad // TB

    # Pad + cast the streamed activations host-side (halves x DMA bytes).
    xp = jnp.zeros((B_pad, S_pad), jnp.float32).at[:B, :S].set(x)
    xp = xp.astype(jnp.bfloat16)

    def resident(arr):
        # Whole array lives in VMEM for every grid step (constant block index).
        return pl.BlockSpec(arr.shape, lambda i: (0,) * arr.ndim)

    flops = 2 * B_pad * (S_pad * HIDDEN + HIDDEN * HIDDEN + HIDDEN * A_pad)
    bytes_accessed = (xp.size * 2 + B_pad * A_pad * 4
                      + sum(int(np.prod(a.shape)) * a.dtype.itemsize
                            for a in kernel_params))

    out = pl.pallas_call(
        dqn_kernel,
        out_shape=jax.ShapeDtypeStruct((B_pad, A_pad), jnp.float32),
        grid=(n_tiles,),
        in_specs=[pl.BlockSpec((TB, S_pad), lambda i: (i, 0)),
                  resident(w1), resident(b1),
                  resident(w2), resident(b2),
                  resident(w3), resident(b3)],
        out_specs=pl.BlockSpec((TB, A_pad), lambda i: (i, 0)),
        compiler_params=pltpu.CompilerParams(
            dimension_semantics=("parallel",)),
        cost_estimate=pl.CostEstimate(flops=flops, transcendentals=0,
                                      bytes_accessed=bytes_accessed),
    )(xp, w1, b1, w2, b2, w3, b3)

    return out[:B, :A]


# ---------------------------------------------------------------------------
# Deterministic synthetic parameters + references
# ---------------------------------------------------------------------------
def init_params(key, state_size, action_size):
    """Shapes match the nn.Module; BN uses synthetic running stats."""
    ks = jax.random.split(key, 12)

    def linear(kw, kb, fan_in, fan_out):
        bound = 1.0 / np.sqrt(fan_in)
        w = jax.random.uniform(kw, (fan_in, fan_out), jnp.float32, -bound, bound)
        b = jax.random.uniform(kb, (1, fan_out), jnp.float32, -bound, bound)
        return w, b

    def bn(kg, kb, km, kv, feat):
        gamma = jax.random.uniform(kg, (1, feat), jnp.float32, 0.5, 1.5)
        beta = 0.1 * jax.random.normal(kb, (1, feat), jnp.float32)
        rmean = 0.1 * jax.random.normal(km, (1, feat), jnp.float32)
        rvar = jax.random.uniform(kv, (1, feat), jnp.float32, 0.5, 1.5)
        scale = gamma / jnp.sqrt(rvar + BN_EPS)
        shift = beta - rmean * scale
        return scale, shift

    w1, b1 = linear(ks[0], ks[1], state_size, HIDDEN)
    s1, t1 = bn(ks[2], ks[3], ks[4], ks[5], HIDDEN)
    w2, b2 = linear(ks[6], ks[7], HIDDEN, HIDDEN)
    s2, t2 = bn(ks[8], ks[9], ks[10], ks[11], HIDDEN)
    kw3, kb3 = jax.random.split(jax.random.fold_in(key, 99))
    w3, b3 = linear(kw3, kb3, HIDDEN, action_size)
    return (w1, b1, s1, t1, w2, b2, s2, t2, w3, b3)


def dqn_reference(x, params):
    """Full-precision pure-JAX reference with original module semantics."""
    (w1, b1, s1, t1, w2, b2, s2, t2, w3, b3) = params
    leaky = lambda v: jnp.where(v > 0, v, LEAKY_SLOPE * v)
    h = leaky(x @ w1 + b1) * s1 + t1
    h = leaky(h @ w2 + b2) * s2 + t2
    return h @ w3 + b3


def dqn_kernel_reference(x, kernel_params, meta):
    """Pure-JAX mirror of the kernel math (folded BN, bf16 matmul operands)."""
    w1, b1, w2, b2, w3, b3 = kernel_params
    S, S_pad, A, A_pad = meta
    xp = jnp.zeros((x.shape[0], S_pad), jnp.float32).at[:, :S].set(x)
    xp = xp.astype(jnp.bfloat16)
    leaky = lambda v: jnp.where(v > 0, v, LEAKY_SLOPE * v)
    h = leaky(jnp.dot(xp, w1, preferred_element_type=jnp.float32) + b1)
    h = leaky(jnp.dot(h.astype(jnp.bfloat16), w2,
                      preferred_element_type=jnp.float32) + b2)
    out = jnp.dot(h.astype(jnp.bfloat16), w3,
                  preferred_element_type=jnp.float32) + b3
    return out[:, :A]


if __name__ == "__main__":
    STATE_SIZE = 16   # e.g. LIDAR feature vector
    ACTION_SIZE = 8
    BATCH = 8         # small demo batch; kernel tiles any batch size

    key = jax.random.PRNGKey(0)
    k_x, k_p = jax.random.split(key)

    x = jax.random.normal(k_x, (BATCH, STATE_SIZE), jnp.float32)
    params = init_params(k_p, STATE_SIZE, ACTION_SIZE)
    kernel_params, meta = prepare_kernel_params(params)

    out = dqn_forward(x, kernel_params, meta)
    out = jax.block_until_ready(out)

    # Tight check against a pure-JAX mirror of the kernel math (same bf16 casts).
    ref_mirror = dqn_kernel_reference(x, kernel_params, meta)
    np.testing.assert_allclose(np.asarray(out), np.asarray(ref_mirror),
                               rtol=5e-3, atol=5e-3)

    # Loose check against the full-precision original-semantics reference
    # (bf16 matmul operands introduce ~1e-3-level rounding).
    ref_full = dqn_reference(x, params)
    np.testing.assert_allclose(np.asarray(out), np.asarray(ref_full),
                               rtol=5e-2, atol=5e-2)

    print("KERNEL_OK")
</pallas_src>

<mosaic_0001>
module attributes {stable_mosaic.version = 11 : i64} {
  func.func @dqn_kernel(%arg0: i32, %arg1: memref<16x128xbf16, #tpu.memory_space<vmem>>, %arg2: memref<128x256xbf16, #tpu.memory_space<vmem>>, %arg3: memref<1x256xf32, #tpu.memory_space<vmem>>, %arg4: memref<256x256xbf16, #tpu.memory_space<vmem>>, %arg5: memref<1x256xf32, #tpu.memory_space<vmem>>, %arg6: memref<256x128xbf16, #tpu.memory_space<vmem>>, %arg7: memref<1x128xf32, #tpu.memory_space<vmem>>, %arg8: memref<16x128xf32, #tpu.memory_space<vmem>>) attributes {dimension_semantics = [#tpu.dimension_semantics<parallel>], iteration_bounds = array<i64: 1>, scalar_prefetch = 0 : i64, scratch_operands = 0 : i64, tpu.core_type = #tpu.core_type<tc>, window_params = [{transform_indices = @transform_0, window_bounds = array<i64: 16, 128>}, {pipeline_mode = #tpu.pipeline_mode<synchronous>, transform_indices = @transform_1, window_bounds = array<i64: 128, 256>}, {pipeline_mode = #tpu.pipeline_mode<synchronous>, transform_indices = @transform_2, window_bounds = array<i64: 1, 256>}, {pipeline_mode = #tpu.pipeline_mode<synchronous>, transform_indices = @transform_3, window_bounds = array<i64: 256, 256>}, {pipeline_mode = #tpu.pipeline_mode<synchronous>, transform_indices = @transform_4, window_bounds = array<i64: 1, 256>}, {pipeline_mode = #tpu.pipeline_mode<synchronous>, transform_indices = @transform_5, window_bounds = array<i64: 256, 128>}, {pipeline_mode = #tpu.pipeline_mode<synchronous>, transform_indices = @transform_6, window_bounds = array<i64: 1, 128>}, {transform_indices = @transform_7, window_bounds = array<i64: 16, 128>}]} {
    %c0 = arith.constant 0 : index
    %c0_0 = arith.constant 0 : index
    %0 = vector.load %arg1[%c0, %c0_0] : memref<16x128xbf16, #tpu.memory_space<vmem>>, vector<16x128xbf16>
    %c0_1 = arith.constant 0 : index
    %c0_2 = arith.constant 0 : index
    %1 = vector.load %arg2[%c0_1, %c0_2] : memref<128x256xbf16, #tpu.memory_space<vmem>>, vector<128x256xbf16>
    %cst = arith.constant dense<0.000000e+00> : vector<16x256xf32>
    %2 = tpu.matmul %0, %1, %cst {dimension_numbers = #tpu.dot_dimension_numbers<[1], [0], [0], [1], [0, 0, 1, 1], [], []>} : vector<16x128xbf16>, vector<128x256xbf16>, vector<16x256xf32> -> vector<16x256xf32>
    %c0_3 = arith.constant 0 : index
    %c0_4 = arith.constant 0 : index
    %3 = vector.load %arg3[%c0_3, %c0_4] : memref<1x256xf32, #tpu.memory_space<vmem>>, vector<1x256xf32>
    %4 = vector.broadcast %3 : vector<1x256xf32> to vector<16x256xf32>
    %5 = arith.addf %2, %4 : vector<16x256xf32>
    %cst_5 = arith.constant 0.000000e+00 : f32
    %6 = vector.broadcast %cst_5 : f32 to vector<16x256xf32>
    %7 = arith.cmpf ogt, %5, %6 : vector<16x256xf32>
    %cst_6 = arith.constant 0.00999999977 : f32
    %8 = vector.broadcast %cst_6 : f32 to vector<16x256xf32>
    %9 = arith.mulf %8, %5 : vector<16x256xf32>
    %10 = arith.select %7, %5, %9 : vector<16x256xi1>, vector<16x256xf32>
    %11 = arith.truncf %10 : vector<16x256xf32> to vector<16x256xbf16>
    %c0_7 = arith.constant 0 : index
    %c0_8 = arith.constant 0 : index
    %12 = vector.load %arg4[%c0_7, %c0_8] : memref<256x256xbf16, #tpu.memory_space<vmem>>, vector<256x256xbf16>
    %cst_9 = arith.constant dense<0.000000e+00> : vector<16x256xf32>
    %13 = tpu.matmul %11, %12, %cst_9 {dimension_numbers = #tpu.dot_dimension_numbers<[1], [0], [0], [1], [0, 0, 1, 1], [], []>} : vector<16x256xbf16>, vector<256x256xbf16>, vector<16x256xf32> -> vector<16x256xf32>
    %c0_10 = arith.constant 0 : index
    %c0_11 = arith.constant 0 : index
    %14 = vector.load %arg5[%c0_10, %c0_11] : memref<1x256xf32, #tpu.memory_space<vmem>>, vector<1x256xf32>
    %15 = vector.broadcast %14 : vector<1x256xf32> to vector<16x256xf32>
    %16 = arith.addf %13, %15 : vector<16x256xf32>
    %cst_12 = arith.constant 0.000000e+00 : f32
    %17 = vector.broadcast %cst_12 : f32 to vector<16x256xf32>
    %18 = arith.cmpf ogt, %16, %17 : vector<16x256xf32>
    %cst_13 = arith.constant 0.00999999977 : f32
    %19 = vector.broadcast %cst_13 : f32 to vector<16x256xf32>
    %20 = arith.mulf %19, %16 : vector<16x256xf32>
    %21 = arith.select %18, %16, %20 : vector<16x256xi1>, vector<16x256xf32>
    %22 = arith.truncf %21 : vector<16x256xf32> to vector<16x256xbf16>
    %c0_14 = arith.constant 0 : index
    %c0_15 = arith.constant 0 : index
    %23 = vector.load %arg6[%c0_14, %c0_15] : memref<256x128xbf16, #tpu.memory_space<vmem>>, vector<256x128xbf16>
    %cst_16 = arith.constant dense<0.000000e+00> : vector<16x128xf32>
    %24 = tpu.matmul %22, %23, %cst_16 {dimension_numbers = #tpu.dot_dimension_numbers<[1], [0], [0], [1], [0, 0, 1, 1], [], []>} : vector<16x256xbf16>, vector<256x128xbf16>, vector<16x128xf32> -> vector<16x128xf32>
    %c0_17 = arith.constant 0 : index
    %c0_18 = arith.constant 0 : index
    %25 = vector.load %arg7[%c0_17, %c0_18] : memref<1x128xf32, #tpu.memory_space<vmem>>, vector<1x128xf32>
    %26 = vector.broadcast %25 : vector<1x128xf32> to vector<16x128xf32>
    %27 = arith.addf %24, %26 : vector<16x128xf32>
    %c0_19 = arith.constant 0 : index
    %c0_20 = arith.constant 0 : index
    %28 = vector.load %arg8[%c0_19, %c0_20] : memref<16x128xf32, #tpu.memory_space<vmem>>, vector<16x128xf32>
    tpu.vector_store %arg8[%c0_19, %c0_20], %27 {strides = array<i32>} : memref<16x128xf32, #tpu.memory_space<vmem>>, vector<16x128xf32>,
    return
  }
  func.func @transform_0(%arg0: i32) -> (i32, i32) {
    %c0_i32 = arith.constant 0 : i32
    %c0_i32_0 = arith.constant 0 : i32
    return %arg0, %c0_i32 : i32, i32
  }
  func.func @transform_1(%arg0: i32) -> (i32, i32) {
    %c0_i32 = arith.constant 0 : i32
    %c0_i32_0 = arith.constant 0 : i32
    %c0_i32_1 = arith.constant 0 : i32
    return %c0_i32, %c0_i32_0 : i32, i32
  }
  func.func @transform_2(%arg0: i32) -> (i32, i32) {
    %c0_i32 = arith.constant 0 : i32
    %c0_i32_0 = arith.constant 0 : i32
    %c0_i32_1 = arith.constant 0 : i32
    return %c0_i32, %c0_i32_0 : i32, i32
  }
  func.func @transform_3(%arg0: i32) -> (i32, i32) {
    %c0_i32 = arith.constant 0 : i32
    %c0_i32_0 = arith.constant 0 : i32
    %c0_i32_1 = arith.constant 0 : i32
    return %c0_i32, %c0_i32_0 : i32, i32
  }
  func.func @transform_4(%arg0: i32) -> (i32, i32) {
    %c0_i32 = arith.constant 0 : i32
    %c0_i32_0 = arith.constant 0 : i32
    %c0_i32_1 = arith.constant 0 : i32
    return %c0_i32, %c0_i32_0 : i32, i32
  }
  func.func @transform_5(%arg0: i32) -> (i32, i32) {
    %c0_i32 = arith.constant 0 : i32
    %c0_i32_0 = arith.constant 0 : i32
    %c0_i32_1 = arith.constant 0 : i32
    return %c0_i32, %c0_i32_0 : i32, i32
  }
  func.func @transform_6(%arg0: i32) -> (i32, i32) {
    %c0_i32 = arith.constant 0 : i32
    %c0_i32_0 = arith.constant 0 : i32
    %c0_i32_1 = arith.constant 0 : i32
    return %c0_i32, %c0_i32_0 : i32, i32
  }
  func.func @transform_7(%arg0: i32) -> (i32, i32) {
    %c0_i32 = arith.constant 0 : i32
    %c0_i32_0 = arith.constant 0 : i32
    return %arg0, %c0_i32 : i32, i32
  }
}

</mosaic_0001>

<llo_original>
// kernel: tpu_custom_call.1
$region0: #{tpu_custom_call.1}
  #allocation0 [shape = 'u32[]', space=smem, size = 0x4, offset = 0x4, fixed_abs, tag = 'smem constant byte address 0x4 - core index']
  #allocation1 [shape = 'u32[144,128]{1,0:T(1,128)}', space=vmem, size = 0x12000, scoped, tag = 'internal scratch']
  %s0 = inlined_call_operand.hbm [shape: bf16[16,128], index: 0, kind: input, shape index: {}]
  %s1 = inlined_call_operand.hbm [shape: bf16[128,256], index: 1, kind: input, shape index: {}]
  %s2 = inlined_call_operand.vmem [shape: f32[1,256], index: 2, kind: input, shape index: {}]
  %s3 = inlined_call_operand.hbm [shape: bf16[256,256], index: 3, kind: input, shape index: {}]
  %s4 = inlined_call_operand.vmem [shape: f32[1,256], index: 4, kind: input, shape index: {}]
  %s5 = inlined_call_operand.hbm [shape: bf16[256,128], index: 5, kind: input, shape index: {}]
  %s6 = inlined_call_operand.vmem [shape: f32[1,128], index: 6, kind: input, shape index: {}]
  %s7 = inlined_call_operand.hbm [shape: f32[16,128], index: 7, kind: output, shape index: {}]
  %s8 = sld [smem:[#allocation0]]
  $region54: #{tpu_custom_call.1} parent=0
    _
  %s10 = ssub.s32 1, %s8
  %s11 = scalar_select 0, %s10, %s8
  $region1: #{tpu_custom_call.1} parent=0
    #allocation2 [shape = 'u8[4096]{0}', space=vmem, size = 0x1000, scoped, tag = 'input window, operand 0, single buffered']
    #allocation3 [shape = 's32[1]{0}', space=sflag, size = 0x4, scoped, tag = 'scoped memory for tpu_custom_call.1']
    #allocation4 [shape = 's32[1]{0}', space=sflag, size = 0x4, scoped, tag = 'scoped memory for tpu_custom_call.1']
    #allocation5 [shape = 'u8[65536]{0}', space=vmem, size = 0x10000, scoped, tag = 'input window, operand 1, single buffered']
    #allocation6 [shape = 's32[1]{0}', space=sflag, size = 0x4, scoped, tag = 'scoped memory for tpu_custom_call.1']
    #allocation7 [shape = 'u8[131072]{0}', space=vmem, size = 0x20000, scoped, tag = 'input window, operand 3, single buffered']
    #allocation8 [shape = 'u8[65536]{0}', space=vmem, size = 0x10000, scoped, tag = 'input window, operand 5, single buffered']
    #allocation9 [shape = 's32[1]{0}', space=sflag, size = 0x4, scoped, tag = 'scoped memory for tpu_custom_call.1']
    #allocation10 [shape = 'u8[8192]{0}', space=vmem, size = 0x2000, scoped, tag = 'output window, operand 0, single buffered']
    %12 = vsyncpa [#allocation3], 0
    %13 = vsyncpa [#allocation6], 0
    %14 = vsyncpa [#allocation9], 0
    %15 = vsyncpa [#allocation4], 0
    // Predicated region
    $region2: #{tpu_custom_call.1} parent=1 // pred_check
      _
    $region3: #{tpu_custom_call.1} parent=1 // pred_check_branch
      %17 = sbr.rel (0) target = $region5
    $region4: #{tpu_custom_call.1} parent=1 // pred_region
      %s19 = ssub.s32 128, 128
      %20 = vsyncadd [#allocation3], %s19
      %s21 = sshll.u32 [#allocation2], 4
      %s22 = int_to_ptr.vmem [resolvable:$true] %s21
      %27 = dma.hbm_to_vmem [thread:$0]  %s0, 128, %s22, [#allocation3], 64, 64, 4
    $region5: #{tpu_custom_call.1} parent=1 // pred_fallthru
      _
    // Predicated region
    $region6: #{tpu_custom_call.1} parent=1 // pred_check
      _
    $region7: #{tpu_custom_call.1} parent=1 // pred_check_branch
      %29 = sbr.rel (0) target = $region9
    $region8: #{tpu_custom_call.1} parent=1 // pred_region
      %s31 = ssub.s32 2048, 2048
      %32 = vsyncadd [#allocation6], %s31
      %s33 = sshll.u32 [#allocation5], 4
      %s34 = int_to_ptr.vmem [resolvable:$true] %s33
      %39 = dma.hbm_to_vmem [thread:$0]  %s1, 2048, %s34, [#allocation6], 128, 128, 8
    $region9: #{tpu_custom_call.1} parent=1 // pred_fallthru
      _
    // Predicated region
    $region10: #{tpu_custom_call.1} parent=1 // pred_check
      _
    $region11: #{tpu_custom_call.1} parent=1 // pred_check_branch
      %41 = sbr.rel (0) target = $region13
    $region12: #{tpu_custom_call.1} parent=1 // pred_region
      _
    $region13: #{tpu_custom_call.1} parent=1 // pred_fallthru
      _
    // Predicated region
    $region14: #{tpu_custom_call.1} parent=1 // pred_check
      _
    $region15: #{tpu_custom_call.1} parent=1 // pred_check_branch
      %43 = sbr.rel (0) target = $region17
    $region16: #{tpu_custom_call.1} parent=1 // pred_region
      %s45 = ssub.s32 4096, 4096
      %46 = vsyncadd [#allocation6], %s45
      %s47 = sshll.u32 [#allocation7], 4
      %s48 = int_to_ptr.vmem [resolvable:$true] %s47
      %53 = dma.hbm_to_vmem [thread:$0]  %s3, 4096, %s48, [#allocation6], 128, 128, 8
    $region17: #{tpu_custom_call.1} parent=1 // pred_fallthru
      _
    // Predicated region
    $region18: #{tpu_custom_call.1} parent=1 // pred_check
      _
    $region19: #{tpu_custom_call.1} parent=1 // pred_check_branch
      %55 = sbr.rel (0) target = $region21
    $region20: #{tpu_custom_call.1} parent=1 // pred_region
      _
    $region21: #{tpu_custom_call.1} parent=1 // pred_fallthru
      _
    // Predicated region
    $region22: #{tpu_custom_call.1} parent=1 // pred_check
      _
    $region23: #{tpu_custom_call.1} parent=1 // pred_check_branch
      %57 = sbr.rel (0) target = $region25
    $region24: #{tpu_custom_call.1} parent=1 // pred_region
      %s59 = ssub.s32 2048, 2048
      %60 = vsyncadd [#allocation9], %s59
      %s61 = sshll.u32 [#allocation8], 4
      %s62 = int_to_ptr.vmem [resolvable:$true] %s61
      %67 = dma.hbm_to_vmem [thread:$0]  %s5, 2048, %s62, [#allocation9], 64, 64, 4
    $region25: #{tpu_custom_call.1} parent=1 // pred_fallthru
      _
    // Predicated region
    $region26: #{tpu_custom_call.1} parent=1 // pred_check
      _
    $region27: #{tpu_custom_call.1} parent=1 // pred_check_branch
      %69 = sbr.rel (0) target = $region29
    $region28: #{tpu_custom_call.1} parent=1 // pred_region
      _
    $region29: #{tpu_custom_call.1} parent=1 // pred_fallthru
      _
    // Predicated region
    $region30: #{tpu_custom_call.1} parent=1 // pred_check
      _
    $region31: #{tpu_custom_call.1} parent=1 // pred_check_branch
      %71 = sbr.rel (0) target = $region33
    $region32: #{tpu_custom_call.1} parent=1 // pred_region
      %72 = dma.done [#allocation3], 128
    $region33: #{tpu_custom_call.1} parent=1 // pred_fallthru
      _
    // Predicated region
    $region34: #{tpu_custom_call.1} parent=1 // pred_check
      _
    $region35: #{tpu_custom_call.1} parent=1 // pred_check_branch
      %74 = sbr.rel (0) target = $region37
    $region36: #{tpu_custom_call.1} parent=1 // pred_region
      %75 = dma.done [#allocation6], 2048
    $region37: #{tpu_custom_call.1} parent=1 // pred_fallthru
      _
    // Predicated region
    $region38: #{tpu_custom_call.1} parent=1 // pred_check
      _
    $region39: #{tpu_custom_call.1} parent=1 // pred_check_branch
      %77 = sbr.rel (0) target = $region41
    $region40: #{tpu_custom_call.1} parent=1 // pred_region
      %78 = dma.done [#allocation6], 4096
    $region41: #{tpu_custom_call.1} parent=1 // pred_fallthru
      _
    // Predicated region
    $region42: #{tpu_custom_call.1} parent=1 // pred_check
      _
    $region43: #{tpu_custom_call.1} parent=1 // pred_check_branch
      %80 = sbr.rel (0) target = $region45
    $region44: #{tpu_custom_call.1} parent=1 // pred_region
      %81 = dma.done [#allocation9], 2048
    $region45: #{tpu_custom_call.1} parent=1 // pred_fallthru
      _
    %v83 = vld [vmem:[#allocation2] sm:$0xf]
    %v84 = vld [vmem:[#allocation2 + $0x4] sm:$0xf]
    %v85 = vld [vmem:[#allocation5] sm:$0xff]
    %v86 = vld [vmem:[#allocation5 + $0x8] sm:$0xff]
    %v87 = vld [vmem:[#allocation5 + $0x10] sm:$0xff]
    %v88 = vld [vmem:[#allocation5 + $0x18] sm:$0xff]
    %v89 = vld [vmem:[#allocation5 + $0x20] sm:$0xff]
    %v90 = vld [vmem:[#allocation5 + $0x28] sm:$0xff]
    %v91 = vld [vmem:[#allocation5 + $0x30] sm:$0xff]
    %v92 = vld [vmem:[#allocation5 + $0x38] sm:$0xff]
    %v93 = vld [vmem:[#allocation5 + $0x40] sm:$0xff]
    %v94 = vld [vmem:[#allocation5 + $0x48] sm:$0xff]
    %v95 = vld [vmem:[#allocation5 + $0x50] sm:$0xff]
    %v96 = vld [vmem:[#allocation5 + $0x58] sm:$0xff]
    %v97 = vld [vmem:[#allocation5 + $0x60] sm:$0xff]
    %v98 = vld [vmem:[#allocation5 + $0x68] sm:$0xff]
    %v99 = vld [vmem:[#allocation5 + $0x70] sm:$0xff]
    %v100 = vld [vmem:[#allocation5 + $0x78] sm:$0xff]
    %v101 = vld [vmem:[%s2] sm:$0x3]
    %v103 = vlaneseq
    %v104 = vshrl.u32 %v103, 7
    %v105 = vsub.s32 0, %v104
    %v106 = vrot.slane %v101, %v105
    %v107 = vlaneseq
    %v108 = vshrl.u32 %v107, 7
    %v109 = vsub.s32 1, %v108
    %v110 = vrot.slane %v101, %v109
    %v115 = vunpack.c.l.b16 %v83
    %v116 = vunpack.c.l.b16 %v84
    %v117 = vpack.c.b16 %v116, %v115
    %v135 = vunpack.c.l.b16 %v85
    %v136 = vunpack.c.h.b16 %v85
    %v137 = vunpack.c.l.b16 %v86
    %v138 = vunpack.c.h.b16 %v86
    %v139 = vunpack.c.l.b16 %v87
    %v140 = vunpack.c.h.b16 %v87
    %v141 = vunpack.c.l.b16 %v88
    %v142 = vunpack.c.h.b16 %v88
    %v143 = vunpack.c.l.b16 %v89
    %v144 = vunpack.c.h.b16 %v89
    %v145 = vunpack.c.l.b16 %v90
    %v146 = vunpack.c.h.b16 %v90
    %v147 = vunpack.c.l.b16 %v91
    %v148 = vunpack.c.h.b16 %v91
    %v149 = vunpack.c.l.b16 %v92
    %v150 = vunpack.c.h.b16 %v92
    %v151 = vunpack.c.l.b16 %v93
    %v152 = vunpack.c.h.b16 %v93
    %v153 = vunpack.c.l.b16 %v94
    %v154 = vunpack.c.h.b16 %v94
    %v155 = vunpack.c.l.b16 %v95
    %v156 = vunpack.c.h.b16 %v95
    %v157 = vunpack.c.l.b16 %v96
    %v158 = vunpack.c.h.b16 %v96
    %v159 = vunpack.c.l.b16 %v97
    %v160 = vunpack.c.h.b16 %v97
    %v161 = vunpack.c.l.b16 %v98
    %v162 = vunpack.c.h.b16 %v98
    %v163 = vunpack.c.l.b16 %v99
    %v164 = vunpack.c.h.b16 %v99
    %v165 = vunpack.c.l.b16 %v100
    %v166 = vunpack.c.h.b16 %v100
    %v167 = vpack.c.b16 %v137, %v135
    %v168 = vpack.c.b16 %v138, %v136
    %v169 = vpack.c.b16 %v141, %v139
    %v170 = vpack.c.b16 %v142, %v140
    %v171 = vpack.c.b16 %v145, %v143
    %v172 = vpack.c.b16 %v146, %v144
    %v173 = vpack.c.b16 %v149, %v147
    %v174 = vpack.c.b16 %v150, %v148
    %v175 = vpack.c.b16 %v153, %v151
    %v176 = vpack.c.b16 %v154, %v152
    %v177 = vpack.c.b16 %v157, %v155
    %v178 = vpack.c.b16 %v158, %v156
    %v179 = vpack.c.b16 %v161, %v159
    %v180 = vpack.c.b16 %v162, %v160
    %v181 = vpack.c.b16 %v165, %v163
    %v182 = vpack.c.b16 %v166, %v164
    %199 = vmatprep.subr.bf16.mxu0 %v168
    %200 = vmatpush1.bf16.msra.mxu0 %v167
    %201 = vmatprep.subr.bf16.mxu0 %v170
    %202 = vmatpush1.bf16.msra.mxu0 %v169
    %203 = vmatprep.subr.bf16.mxu0 %v172
    %204 = vmatpush1.bf16.msra.mxu0 %v171
    %205 = vmatprep.subr.bf16.mxu0 %v174
    %206 = vmatpush1.bf16.msra.mxu0 %v173
    %207 = vmatprep.subr.bf16.mxu0 %v176
    %208 = vmatpush1.bf16.msra.mxu0 %v175
    %209 = vmatprep.subr.bf16.mxu0 %v178
    %210 = vmatpush1.bf16.msra.mxu0 %v177
    %211 = vmatprep.subr.bf16.mxu0 %v180
    %212 = vmatpush1.bf16.msra.mxu0 %v179
    %213 = vmatprep.subr.bf16.mxu0 %v182
    %214 = vmatpush1.bf16.msra.mxu0 %v181
    %215 = vmatprep.subr.bf16.mxu0 0
    %216 = vmatpush1.bf16.msra.mxu0 0
    %217 = vmatprep.subr.bf16.mxu0 0
    %218 = vmatpush1.bf16.msra.mxu0 0
    %219 = vmatprep.subr.bf16.mxu0 0
    %220 = vmatpush1.bf16.msra.mxu0 0
    %221 = vmatprep.subr.bf16.mxu0 0
    %222 = vmatpush1.bf16.msra.mxu0 0
    %223 = vmatprep.subr.bf16.mxu0 0
    %224 = vmatpush1.bf16.msra.mxu0 0
    %225 = vmatprep.subr.bf16.mxu0 0
    %226 = vmatpush1.bf16.msra.mxu0 0
    %227 = vmatprep.subr.bf16.mxu0 0
    %228 = vmatpush1.bf16.msra.mxu0 0
    %229 = vmatprep.subr.bf16.mxu0 0
    %230 = vmatpush1.bf16.msra.mxu0 0
    %231 = vmatprep.mubr.bf16.mxu0 0
    %232 = vmatmul.mubr.bf16.gmra.mrb[0].mxu0 %v117
    %v233 = vpop.f32.mrb[0].mxu0
    %v234 = vadd.f32 %v106, %v233
    %v235 = vpop.f32.mrb[0].mxu0
    %v236 = vadd.f32 %v110, %v235
    %v237 = vpop.f32.mrb[0].mxu0
    %v238 = vadd.f32 %v106, %v237
    %v239 = vpop.f32.mrb[0].mxu0
    %v240 = vadd.f32 %v110, %v239
    %241 = vdwg.mxu0
    %vm242 = vcmp.gt.f32.partialorder %v234, 0.0
    %vm243 = vcmp.gt.f32.partialorder %v236, 0.0
    %vm244 = vcmp.gt.f32.partialorder %v238, 0.0
    %vm245 = vcmp.gt.f32.partialorder %v240, 0.0
    %v246 = vmul.f32 %v234, 0.01
    %v247 = vmul.f32 %v236, 0.01
    %v248 = vmul.f32 %v238, 0.01
    %v249 = vmul.f32 %v240, 0.01
    %v250 = vsel %vm242, %v234, %v246
    %v251 = vsel %vm243, %v236, %v247
    %v252 = vsel %vm244, %v238, %v248
    %v253 = vsel %vm245, %v240, %v249
    %v254 = vpack.c.bf16 %v252, %v250
    %v255 = vpack.c.bf16 %v253, %v251
    %v256 = vld [vmem:[#allocation7] sm:$0xff]
    %v257 = vld [vmem:[#allocation7 + $0x8] sm:$0xff]
    %v258 = vld [vmem:[#allocation7 + $0x10] sm:$0xff]
    %v259 = vld [vmem:[#allocation7 + $0x18] sm:$0xff]
    %v260 = vld [vmem:[#allocation7 + $0x20] sm:$0xff]
    %v261 = vld [vmem:[#allocation7 + $0x28] sm:$0xff]
    %v262 = vld [vmem:[#allocation7 + $0x30] sm:$0xff]
    %v263 = vld [vmem:[#allocation7 + $0x38] sm:$0xff]
    %v264 = vld [vmem:[#allocation7 + $0x40] sm:$0xff]
    %v265 = vld [vmem:[#allocation7 + $0x48] sm:$0xff]
    %v266 = vld [vmem:[#allocation7 + $0x50] sm:$0xff]
    %v267 = vld [vmem:[#allocation7 + $0x58] sm:$0xff]
    %v268 = vld [vmem:[#allocation7 + $0x60] sm:$0xff]
    %v269 = vld [vmem:[#allocation7 + $0x68] sm:$0xff]
    %v270 = vld [vmem:[#allocation7 + $0x70] sm:$0xff]
    %v271 = vld [vmem:[#allocation7 + $0x78] sm:$0xff]
    %v272 = vld [vmem:[#allocation7 + $0x80] sm:$0xff]
    %v273 = vld [vmem:[#allocation7 + $0x88] sm:$0xff]
    %v274 = vld [vmem:[#allocation7 + $0x90] sm:$0xff]
    %v275 = vld [vmem:[#allocation7 + $0x98] sm:$0xff]
    %v276 = vld [vmem:[#allocation7 + $0xa0] sm:$0xff]
    %v277 = vld [vmem:[#allocation7 + $0xa8] sm:$0xff]
    %v278 = vld [vmem:[#allocation7 + $0xb0] sm:$0xff]
    %v279 = vld [vmem:[#allocation7 + $0xb8] sm:$0xff]
    %v280 = vld [vmem:[#allocation7 + $0xc0] sm:$0xff]
    %v281 = vld [vmem:[#allocation7 + $0xc8] sm:$0xff]
    %v282 = vld [vmem:[#allocation7 + $0xd0] sm:$0xff]
    %v283 = vld [vmem:[#allocation7 + $0xd8] sm:$0xff]
    %v284 = vld [vmem:[#allocation7 + $0xe0] sm:$0xff]
    %v285 = vld [vmem:[#allocation7 + $0xe8] sm:$0xff]
    %v286 = vld [vmem:[#allocation7 + $0xf0] sm:$0xff]
    %v287 = vld [vmem:[#allocation7 + $0xf8] sm:$0xff]
    %v288 = vld [vmem:[%s4] sm:$0x3]
    %v290 = vlaneseq
    %v291 = vshrl.u32 %v290, 7
    %v292 = vsub.s32 0, %v291
    %v293 = vrot.slane %v288, %v292
    %v294 = vlaneseq
    %v295 = vshrl.u32 %v294, 7
    %v296 = vsub.s32 1, %v295
    %v297 = vrot.slane %v288, %v296
    %v332 = vunpack.c.l.b16 %v256
    %v333 = vunpack.c.h.b16 %v256
    %v334 = vunpack.c.l.b16 %v257
    %v335 = vunpack.c.h.b16 %v257
    %v336 = vunpack.c.l.b16 %v258
    %v337 = vunpack.c.h.b16 %v258
    %v338 = vunpack.c.l.b16 %v259
    %v339 = vunpack.c.h.b16 %v259
    %v340 = vunpack.c.l.b16 %v260
    %v341 = vunpack.c.h.b16 %v260
    %v342 = vunpack.c.l.b16 %v261
    %v343 = vunpack.c.h.b16 %v261
    %v344 = vunpack.c.l.b16 %v262
    %v345 = vunpack.c.h.b16 %v262
    %v346 = vunpack.c.l.b16 %v263
    %v347 = vunpack.c.h.b16 %v263
    %v348 = vunpack.c.l.b16 %v264
    %v349 = vunpack.c.h.b16 %v264
    %v350 = vunpack.c.l.b16 %v265
    %v351 = vunpack.c.h.b16 %v265
    %v352 = vunpack.c.l.b16 %v266
    %v353 = vunpack.c.h.b16 %v266
    %v354 = vunpack.c.l.b16 %v267
    %v355 = vunpack.c.h.b16 %v267
    %v356 = vunpack.c.l.b16 %v268
    %v357 = vunpack.c.h.b16 %v268
    %v358 = vunpack.c.l.b16 %v269
    %v359 = vunpack.c.h.b16 %v269
    %v360 = vunpack.c.l.b16 %v270
    %v361 = vunpack.c.h.b16 %v270
    %v362 = vunpack.c.l.b16 %v271
    %v363 = vunpack.c.h.b16 %v271
    %v364 = vunpack.c.l.b16 %v272
    %v365 = vunpack.c.h.b16 %v272
    %v366 = vunpack.c.l.b16 %v273
    %v367 = vunpack.c.h.b16 %v273
    %v368 = vunpack.c.l.b16 %v274
    %v369 = vunpack.c.h.b16 %v274
    %v370 = vunpack.c.l.b16 %v275
    %v371 = vunpack.c.h.b16 %v275
    %v372 = vunpack.c.l.b16 %v276
    %v373 = vunpack.c.h.b16 %v276
    %v374 = vunpack.c.l.b16 %v277
    %v375 = vunpack.c.h.b16 %v277
    %v376 = vunpack.c.l.b16 %v278
    %v377 = vunpack.c.h.b16 %v278
    %v378 = vunpack.c.l.b16 %v279
    %v379 = vunpack.c.h.b16 %v279
    %v380 = vunpack.c.l.b16 %v280
    %v381 = vunpack.c.h.b16 %v280
    %v382 = vunpack.c.l.b16 %v281
    %v383 = vunpack.c.h.b16 %v281
    %v384 = vunpack.c.l.b16 %v282
    %v385 = vunpack.c.h.b16 %v282
    %v386 = vunpack.c.l.b16 %v283
    %v387 = vunpack.c.h.b16 %v283
    %v388 = vunpack.c.l.b16 %v284
    %v389 = vunpack.c.h.b16 %v284
    %v390 = vunpack.c.l.b16 %v285
    %v391 = vunpack.c.h.b16 %v285
    %v392 = vunpack.c.l.b16 %v286
    %v393 = vunpack.c.h.b16 %v286
    %v394 = vunpack.c.l.b16 %v287
    %v395 = vunpack.c.h.b16 %v287
    %v396 = vpack.c.b16 %v334, %v332
    %v397 = vpack.c.b16 %v335, %v333
    %v398 = vpack.c.b16 %v338, %v336
    %v399 = vpack.c.b16 %v339, %v337
    %v400 = vpack.c.b16 %v342, %v340
    %v401 = vpack.c.b16 %v343, %v341
    %v402 = vpack.c.b16 %v346, %v344
    %v403 = vpack.c.b16 %v347, %v345
    %v404 = vpack.c.b16 %v350, %v348
    %v405 = vpack.c.b16 %v351, %v349
    %v406 = vpack.c.b16 %v354, %v352
    %v407 = vpack.c.b16 %v355, %v353
    %v408 = vpack.c.b16 %v358, %v356
    %v409 = vpack.c.b16 %v359, %v357
    %v410 = vpack.c.b16 %v362, %v360
    %v411 = vpack.c.b16 %v363, %v361
    %v412 = vpack.c.b16 %v366, %v364
    %v413 = vpack.c.b16 %v367, %v365
    %v414 = vpack.c.b16 %v370, %v368
    %v415 = vpack.c.b16 %v371, %v369
    %v416 = vpack.c.b16 %v374, %v372
    %v417 = vpack.c.b16 %v375, %v373
    %v418 = vpack.c.b16 %v378, %v376
    %v419 = vpack.c.b16 %v379, %v377
    %v420 = vpack.c.b16 %v382, %v380
    %v421 = vpack.c.b16 %v383, %v381
    %v422 = vpack.c.b16 %v386, %v384
    %v423 = vpack.c.b16 %v387, %v385
    %v424 = vpack.c.b16 %v390, %v388
    %v425 = vpack.c.b16 %v391, %v389
    %v426 = vpack.c.b16 %v394, %v392
    %v427 = vpack.c.b16 %v395, %v393
    %460 = vmatprep.subr.bf16.mxu0 %v397
    %461 = vmatpush1.bf16.msra.mxu0 %v396
    %462 = vmatprep.subr.bf16.mxu0 %v399
    %463 = vmatpush1.bf16.msra.mxu0 %v398
    %464 = vmatprep.subr.bf16.mxu0 %v401
    %465 = vmatpush1.bf16.msra.mxu0 %v400
    %466 = vmatprep.subr.bf16.mxu0 %v403
    %467 = vmatpush1.bf16.msra.mxu0 %v402
    %468 = vmatprep.subr.bf16.mxu0 %v405
    %469 = vmatpush1.bf16.msra.mxu0 %v404
    %470 = vmatprep.subr.bf16.mxu0 %v407
    %471 = vmatpush1.bf16.msra.mxu0 %v406
    %472 = vmatprep.subr.bf16.mxu0 %v409
    %473 = vmatpush1.bf16.msra.mxu0 %v408
    %474 = vmatprep.subr.bf16.mxu0 %v411
    %475 = vmatpush1.bf16.msra.mxu0 %v410
    %476 = vmatprep.subr.bf16.mxu0 %v413
    %477 = vmatpush1.bf16.msra.mxu0 %v412
    %478 = vmatprep.subr.bf16.mxu0 %v415
    %479 = vmatpush1.bf16.msra.mxu0 %v414
    %480 = vmatprep.subr.bf16.mxu0 %v417
    %481 = vmatpush1.bf16.msra.mxu0 %v416
    %482 = vmatprep.subr.bf16.mxu0 %v419
    %483 = vmatpush1.bf16.msra.mxu0 %v418
    %484 = vmatprep.subr.bf16.mxu0 %v421
    %485 = vmatpush1.bf16.msra.mxu0 %v420
    %486 = vmatprep.subr.bf16.mxu0 %v423
    %487 = vmatpush1.bf16.msra.mxu0 %v422
    %488 = vmatprep.subr.bf16.mxu0 %v425
    %489 = vmatpush1.bf16.msra.mxu0 %v424
    %490 = vmatprep.subr.bf16.mxu0 %v427
    %491 = vmatpush1.bf16.msra.mxu0 %v426
    %492 = vmatprep.mubr.bf16.mxu0 %v255
    %493 = vmatmul.mubr.bf16.gmra.mrb[0].mxu0 %v254
    %v494 = vpop.f32.mrb[0].mxu0
    %v495 = vadd.f32 %v293, %v494
    %v496 = vpop.f32.mrb[0].mxu0
    %v497 = vadd.f32 %v297, %v496
    %v498 = vpop.f32.mrb[0].mxu0
    %v499 = vadd.f32 %v293, %v498
    %v500 = vpop.f32.mrb[0].mxu0
    %v501 = vadd.f32 %v297, %v500
    %502 = vdwg.mxu0
    %vm503 = vcmp.gt.f32.partialorder %v495, 0.0
    %vm504 = vcmp.gt.f32.partialorder %v497, 0.0
    %vm505 = vcmp.gt.f32.partialorder %v499, 0.0
    %vm506 = vcmp.gt.f32.partialorder %v501, 0.0
    %v507 = vmul.f32 %v495, 0.01
    %v508 = vmul.f32 %v497, 0.01
    %v509 = vmul.f32 %v499, 0.01
    %v510 = vmul.f32 %v501, 0.01
    %v511 = vsel %vm503, %v495, %v507
    %v512 = vsel %vm504, %v497, %v508
    %v513 = vsel %vm505, %v499, %v509
    %v514 = vsel %vm506, %v501, %v510
    %v515 = vpack.c.bf16 %v513, %v511
    %v516 = vpack.c.bf16 %v514, %v512
    %v517 = vld [vmem:[#allocation8] sm:$0xf]
    %v518 = vld [vmem:[#allocation8 + $0x4] sm:$0xf]
    %v519 = vld [vmem:[#allocation8 + $0x8] sm:$0xf]
    %v520 = vld [vmem:[#allocation8 + $0xc] sm:$0xf]
    %v521 = vld [vmem:[#allocation8 + $0x10] sm:$0xf]
    %v522 = vld [vmem:[#allocation8 + $0x14] sm:$0xf]
    %v523 = vld [vmem:[#allocation8 + $0x18] sm:$0xf]
    %v524 = vld [vmem:[#allocation8 + $0x1c] sm:$0xf]
    %v525 = vld [vmem:[#allocation8 + $0x20] sm:$0xf]
    %v526 = vld [vmem:[#allocation8 + $0x24] sm:$0xf]
    %v527 = vld [vmem:[#allocation8 + $0x28] sm:$0xf]
    %v528 = vld [vmem:[#allocation8 + $0x2c] sm:$0xf]
    %v529 = vld [vmem:[#allocation8 + $0x30] sm:$0xf]
    %v530 = vld [vmem:[#allocation8 + $0x34] sm:$0xf]
    %v531 = vld [vmem:[#allocation8 + $0x38] sm:$0xf]
    %v532 = vld [vmem:[#allocation8 + $0x3c] sm:$0xf]
    %v533 = vld [vmem:[#allocation8 + $0x40] sm:$0xf]
    %v534 = vld [vmem:[#allocation8 + $0x44] sm:$0xf]
    %v535 = vld [vmem:[#allocation8 + $0x48] sm:$0xf]
    %v536 = vld [vmem:[#allocation8 + $0x4c] sm:$0xf]
    %v537 = vld [vmem:[#allocation8 + $0x50] sm:$0xf]
    %v538 = vld [vmem:[#allocation8 + $0x54] sm:$0xf]
    %v539 = vld [vmem:[#allocation8 + $0x58] sm:$0xf]
    %v540 = vld [vmem:[#allocation8 + $0x5c] sm:$0xf]
    %v541 = vld [vmem:[#allocation8 + $0x60] sm:$0xf]
    %v542 = vld [vmem:[#allocation8 + $0x64] sm:$0xf]
    %v543 = vld [vmem:[#allocation8 + $0x68] sm:$0xf]
    %v544 = vld [vmem:[#allocation8 + $0x6c] sm:$0xf]
    %v545 = vld [vmem:[#allocation8 + $0x70] sm:$0xf]
    %v546 = vld [vmem:[#allocation8 + $0x74] sm:$0xf]
    %v547 = vld [vmem:[#allocation8 + $0x78] sm:$0xf]
    %v548 = vld [vmem:[#allocation8 + $0x7c] sm:$0xf]
    %v549 = vld [vmem:[%s6] sm:$0x1]
    %v551 = vlaneseq
    %v552 = vshrl.u32 %v551, 7
    %v553 = vsub.s32 0, %v552
    %v554 = vrot.slane %v549, %v553
    %v588 = vunpack.c.l.b16 %v517
    %v589 = vunpack.c.l.b16 %v518
    %v590 = vunpack.c.l.b16 %v519
    %v591 = vunpack.c.l.b16 %v520
    %v592 = vunpack.c.l.b16 %v521
    %v593 = vunpack.c.l.b16 %v522
    %v594 = vunpack.c.l.b16 %v523
    %v595 = vunpack.c.l.b16 %v524
    %v596 = vunpack.c.l.b16 %v525
    %v597 = vunpack.c.l.b16 %v526
    %v598 = vunpack.c.l.b16 %v527
    %v599 = vunpack.c.l.b16 %v528
    %v600 = vunpack.c.l.b16 %v529
    %v601 = vunpack.c.l.b16 %v530
    %v602 = vunpack.c.l.b16 %v531
    %v603 = vunpack.c.l.b16 %v532
    %v604 = vunpack.c.l.b16 %v533
    %v605 = vunpack.c.l.b16 %v534
    %v606 = vunpack.c.l.b16 %v535
    %v607 = vunpack.c.l.b16 %v536
    %v608 = vunpack.c.l.b16 %v537
    %v609 = vunpack.c.l.b16 %v538
    %v610 = vunpack.c.l.b16 %v539
    %v611 = vunpack.c.l.b16 %v540
    %v612 = vunpack.c.l.b16 %v541
    %v613 = vunpack.c.l.b16 %v542
    %v614 = vunpack.c.l.b16 %v543
    %v615 = vunpack.c.l.b16 %v544
    %v616 = vunpack.c.l.b16 %v545
    %v617 = vunpack.c.l.b16 %v546
    %v618 = vunpack.c.l.b16 %v547
    %v619 = vunpack.c.l.b16 %v548
    %v620 = vpack.c.b16 %v589, %v588
    %v621 = vpack.c.b16 %v591, %v590
    %v622 = vpack.c.b16 %v593, %v592
    %v623 = vpack.c.b16 %v595, %v594
    %v624 = vpack.c.b16 %v597, %v596
    %v625 = vpack.c.b16 %v599, %v598
    %v626 = vpack.c.b16 %v601, %v600
    %v627 = vpack.c.b16 %v603, %v602
    %v628 = vpack.c.b16 %v605, %v604
    %v629 = vpack.c.b16 %v607, %v606
    %v630 = vpack.c.b16 %v609, %v608
    %v631 = vpack.c.b16 %v611, %v610
    %v632 = vpack.c.b16 %v613, %v612
    %v633 = vpack.c.b16 %v615, %v614
    %v634 = vpack.c.b16 %v617, %v616
    %v635 = vpack.c.b16 %v619, %v618
    %652 = vmatprep.subr.bf16.mxu0 0
    %653 = vmatpush1.bf16.msra.mxu0 %v620
    %654 = vmatprep.subr.bf16.mxu0 0
    %655 = vmatpush1.bf16.msra.mxu0 %v621
    %656 = vmatprep.subr.bf16.mxu0 0
    %657 = vmatpush1.bf16.msra.mxu0 %v622
    %658 = vmatprep.subr.bf16.mxu0 0
    %659 = vmatpush1.bf16.msra.mxu0 %v623
    %660 = vmatprep.subr.bf16.mxu0 0
    %661 = vmatpush1.bf16.msra.mxu0 %v624
    %662 = vmatprep.subr.bf16.mxu0 0
    %663 = vmatpush1.bf16.msra.mxu0 %v625
    %664 = vmatprep.subr.bf16.mxu0 0
    %665 = vmatpush1.bf16.msra.mxu0 %v626
    %666 = vmatprep.subr.bf16.mxu0 0
    %667 = vmatpush1.bf16.msra.mxu0 %v627
    %668 = vmatprep.subr.bf16.mxu0 0
    %669 = vmatpush1.bf16.msra.mxu0 %v628
    %670 = vmatprep.subr.bf16.mxu0 0
    %671 = vmatpush1.bf16.msra.mxu0 %v629
    %672 = vmatprep.subr.bf16.mxu0 0
    %673 = vmatpush1.bf16.msra.mxu0 %v630
    %674 = vmatprep.subr.bf16.mxu0 0
    %675 = vmatpush1.bf16.msra.mxu0 %v631
    %676 = vmatprep.subr.bf16.mxu0 0
    %677 = vmatpush1.bf16.msra.mxu0 %v632
    %678 = vmatprep.subr.bf16.mxu0 0
    %679 = vmatpush1.bf16.msra.mxu0 %v633
    %680 = vmatprep.subr.bf16.mxu0 0
    %681 = vmatpush1.bf16.msra.mxu0 %v634
    %682 = vmatprep.subr.bf16.mxu0 0
    %683 = vmatpush1.bf16.msra.mxu0 %v635
    %684 = vmatprep.mubr.bf16.mxu0 %v516
    %685 = vmatmul.mubr.bf16.gmra.mrb[0].mxu0 %v515
    %v686 = vpop.f32.mrb[0].mxu0
    %v687 = vadd.f32 %v554, %v686
    %v688 = vpop.f32.mrb[0].mxu0
    %v689 = vpop.f32.mrb[0].mxu0
    %v690 = vadd.f32 %v554, %v689
    %v691 = vpop.f32.mrb[0].mxu0
    %692 = vdwg.mxu0
    %693 = vst [vmem:[#allocation10] sm:$0xff] %v687
    %694 = vst [vmem:[#allocation10 + $0x8] sm:$0xff] %v690
    // Predicated region
    $region46: #{tpu_custom_call.1} parent=1 // pred_check
      _
    $region47: #{tpu_custom_call.1} parent=1 // pred_check_branch
      %696 = sbr.rel (0) target = $region49
    $region48: #{tpu_custom_call.1} parent=1 // pred_region
      %s698 = ssub.s32 256, 256
      %699 = vsyncadd [#allocation4], %s698
      %s700 = sshll.u32 [#allocation10], 4
      %s701 = int_to_ptr.vmem [resolvable:$true] %s700
      %706 = dma.vmem_to_hbm [thread:$0]  %s701, 256, %s7, [#allocation4], 128, 128, 8
    $region49: #{tpu_custom_call.1} parent=1 // pred_fallthru
      _
    // Predicated region
    $region50: #{tpu_custom_call.1} parent=1 // pred_check
      _
    $region51: #{tpu_custom_call.1} parent=1 // pred_check_branch
      %708 = sbr.rel (0) target = $region53
    $region52: #{tpu_custom_call.1} parent=1 // pred_region
      %709 = dma.done [#allocation4], 256
    $region53: #{tpu_custom_call.1} parent=1 // pred_fallthru
      _
    %710 = vsyncpa [#allocation3], 1
    %711 = vsyncpa [#allocation6], 1
    %712 = vsyncpa [#allocation9], 1
    %713 = vsyncpa [#allocation4], 1

</llo_original>
